<compile_context>
chip_gen: v7x
topology: tpu7x:2x2x1
jax: 0.10.0
libtpu: 0.0.40
codegen_flags: <defaults>
</compile_context>

<pallas_src>
import functools

import jax
import jax.numpy as jnp
from jax.experimental import pallas as pl
from jax.experimental.pallas import tpu as pltpu

LB_POS = 0.9
LB_NEG = 0.005
LB_IGNORE = 255


def _label_smooth_ce_kernel(logits_ref, label_ref, out_ref,
                            *, lb_pos, lb_neg, lb_ignore):
    j = pl.program_id(1)

    # The output block is the per-batch accumulator (resident across the
    # "arbitrary" hw axis): zero it at the first hw tile of each batch item.
    @pl.when(j == 0)
    def _():
        out_ref[...] = jnp.zeros_like(out_ref)

    x = logits_ref[0].astype(jnp.float32)        # (C, block_hw)  class on sublanes
    lab = label_ref[0]                           # (1, block_hw)  int32

    is_pad = lab < 0                             # synthetic padding columns only
    is_ign = lab == lb_ignore                    # ignored pixels
    dead = jnp.logical_or(is_pad, is_ign)
    lab_c = jnp.where(dead, 0, lab)              # label[ignore] = 0

    # Numerically-stable log-softmax over the class (sublane) axis.
    m = jnp.max(x, axis=0, keepdims=True)                        # (1, block_hw)
    lse = jnp.log(jnp.sum(jnp.exp(x - m), axis=0, keepdims=True)) + m
    logs = x - lse                                                # (C, block_hw)

    classes = jax.lax.broadcasted_iota(jnp.int32, logs.shape, 0)  # class index
    one_hot = classes == lab_c                                    # (C, block_hw) bool

    # sum over classes of logs * one_hot  (select instead of mul)
    row1 = jnp.sum(jnp.where(one_hot, logs, 0.0), axis=0, keepdims=True)  # (1, bhw)
    sum_logs = jnp.sum(logs, axis=0, keepdims=True)                       # (1, bhw)

    # loss1 term: ignored pixels still contribute their class-0 log-prob
    # (torch quirk); only synthetic padding columns are excluded.
    row1_term = jnp.where(is_pad, 0.0, row1)
    # smoothed term (algebraic form); zero at ignored + padded pixels.
    row2_term = jnp.where(dead, 0.0,
                          lb_neg * sum_logs + (lb_pos - lb_neg) * row1)
    valid = jnp.where(dead, 0.0, 1.0)

    acc = jnp.concatenate([row1_term, row2_term, valid], axis=0)  # (3, block_hw)
    out_ref[...] += acc[None]


def label_smooth_softmax_ce(logits, label, *, lb_pos=LB_POS, lb_neg=LB_NEG,
                            lb_ignore=LB_IGNORE, block_hw=None):
    """reduction='mean' forward of LabelSmoothSoftmaxCE. Returns a scalar f32.

    Real labels are assumed non-negative (the wrapper uses -1 as a padding
    sentinel for spatial padding columns).
    """
    # TODO(synk): reduction='none' (per-pixel loss) not wired up; module default is 'mean'.
    N, C = logits.shape[0], logits.shape[1]
    HW = 1
    for d in logits.shape[2:]:
        HW *= d

    # Free, contiguous reshapes — no HBM transpose, no wrapper dtype cast.
    x = logits.reshape(N, C, HW)
    lab = label.reshape(N, 1, HW).astype(jnp.int32)

    itemsize = jnp.dtype(x.dtype).itemsize
    hw_pad128 = ((HW + 127) // 128) * 128

    if block_hw is None:
        # Cap so the double-buffered logits tiles stay well under the scoped VMEM
        # limit on every generation (v7x has half the VMEM of v5e/v6e).
        vmem_budget = 8 * 1024 * 1024                      # bytes for 2x logits tile
        cap = max(128, vmem_budget // max(1, 2 * C * itemsize))
        block_hw = min(2048, cap)
        block_hw = max(128, (block_hw // 128) * 128)
    block_hw = min(block_hw, hw_pad128)
    block_hw = max(128, (block_hw // 128) * 128)           # lane-aligned

    num_tiles = pl.cdiv(HW, block_hw)
    HWp = num_tiles * block_hw
    if HWp != HW:
        x = jnp.pad(x, ((0, 0), (0, 0), (0, HWp - HW)))
        lab = jnp.pad(lab, ((0, 0), (0, 0), (0, HWp - HW)), constant_values=-1)

    kernel = functools.partial(_label_smooth_ce_kernel,
                               lb_pos=lb_pos, lb_neg=lb_neg, lb_ignore=lb_ignore)

    partials = pl.pallas_call(
        kernel,
        out_shape=jax.ShapeDtypeStruct((N, 3, block_hw), jnp.float32),
        grid_spec=pltpu.PrefetchScalarGridSpec(
            num_scalar_prefetch=0,
            grid=(N, num_tiles),
            in_specs=[
                pl.BlockSpec((1, C, block_hw), lambda n, j: (n, 0, j)),
                pl.BlockSpec((1, 1, block_hw), lambda n, j: (n, 0, j)),
            ],
            out_specs=pl.BlockSpec((1, 3, block_hw), lambda n, j: (n, 0, 0)),
        ),
        compiler_params=pltpu.CompilerParams(
            dimension_semantics=("parallel", "arbitrary"),
            vmem_limit_bytes=32 * 1024 * 1024,
        ),
    )(x, lab)

    # Tiny final combine in plain JAX: sum lane-partials over batch and lanes.
    sums = jnp.sum(partials, axis=(0, 2))                  # (3,)
    s1, s2, nv = sums[0], sums[1], sums[2]
    # (loss + loss1) / 2 with loss1 = -s1/n_valid, loss = -s2/n_valid.
    # n_valid == 0 -> inf/NaN, matching the reference module.
    return -(s1 + s2) / (2.0 * nv)


def _reference(logits, label, lb_pos, lb_neg, lb_ignore):
    """Pure-JAX transcription of the PyTorch forward (reduction='mean')."""
    logs = jax.nn.log_softmax(logits, axis=1)
    ignore = label == lb_ignore
    n_valid = jnp.sum(~ignore)
    lab = jnp.where(ignore, 0, label)
    one_hot = jax.nn.one_hot(lab, logits.shape[1], axis=1, dtype=logits.dtype)
    loss1 = -jnp.sum(jnp.sum(logs * one_hot, axis=1)) / n_valid
    smooth = lb_pos * one_hot + lb_neg * (1.0 - one_hot)
    smooth = jnp.where(ignore[:, None, :, :], 0.0, smooth)
    loss = -jnp.sum(jnp.sum(logs * smooth, axis=1)) / n_valid
    return (loss + loss1) / 2.0


if __name__ == "__main__":
    key = jax.random.PRNGKey(0)
    k1, k2, k3 = jax.random.split(key, 3)

    N, C, H, W = 2, 4, 16, 16
    logits = jax.random.normal(k1, (N, C, H, W), dtype=jnp.float32)
    label = jax.random.randint(k2, (N, H, W), 0, C, dtype=jnp.int32)
    # sprinkle ignored pixels (lb_ignore = 255)
    ign_mask = jax.random.bernoulli(k3, 0.1, (N, H, W))
    label = jnp.where(ign_mask, LB_IGNORE, label)

    loss = label_smooth_softmax_ce(logits, label)
    loss = jax.block_until_ready(loss)

    ref = _reference(logits, label, LB_POS, LB_NEG, LB_IGNORE)
    assert jnp.allclose(loss, ref, atol=1e-5, rtol=1e-5), (float(loss), float(ref))

    print("KERNEL_OK")
</pallas_src>

<mosaic_0001>
module attributes {stable_mosaic.version = 11 : i64} {
  func.func @_label_smooth_ce_kernel(%arg0: i32, %arg1: i32, %arg2: memref<1x4x256xf32, #tpu.memory_space<vmem>>, %arg3: memref<1x1x256xi32, #tpu.memory_space<vmem>>, %arg4: memref<1x3x256xf32, #tpu.memory_space<vmem>>) attributes {dimension_semantics = [#tpu.dimension_semantics<parallel>, #tpu.dimension_semantics<arbitrary>], iteration_bounds = array<i64: 2, 1>, scalar_prefetch = 0 : i64, scratch_operands = 0 : i64, tpu.core_type = #tpu.core_type<tc>, window_params = [{transform_indices = @transform_0, window_bounds = array<i64: 1, 4, 256>}, {transform_indices = @transform_1, window_bounds = array<i64: 1, 1, 256>}, {transform_indices = @transform_2, window_bounds = array<i64: 1, 3, 256>}]} {
    %c0_i32 = arith.constant 0 : i32
    %0 = arith.cmpi eq, %arg1, %c0_i32 : i32
    %1 = arith.extui %0 : i1 to i32
    %c0_i32_0 = arith.constant 0 : i32
    %2 = arith.cmpi ne, %1, %c0_i32_0 : i32
    scf.if %2 {
      %cst_24 = arith.constant 0.000000e+00 : f32
      %51 = vector.broadcast %cst_24 : f32 to vector<1x3x256xf32>
      %c0_25 = arith.constant 0 : index
      %c0_26 = arith.constant 0 : index
      %c0_27 = arith.constant 0 : index
      %52 = vector.load %arg4[%c0_25, %c0_26, %c0_27] : memref<1x3x256xf32, #tpu.memory_space<vmem>>, vector<1x3x256xf32>
      tpu.vector_store %arg4[%c0_25, %c0_26, %c0_27], %51 {strides = array<i32>} : memref<1x3x256xf32, #tpu.memory_space<vmem>>, vector<1x3x256xf32>,
    } else {
    }
    %c0 = arith.constant 0 : index
    %c0_1 = arith.constant 0 : index
    %c0_2 = arith.constant 0 : index
    %3 = vector.load %arg2[%c0, %c0_1, %c0_2] : memref<1x4x256xf32, #tpu.memory_space<vmem>>, vector<1x4x256xf32>
    %4 = vector.shape_cast %3 : vector<1x4x256xf32> to vector<4x256xf32>
    %c0_3 = arith.constant 0 : index
    %c0_4 = arith.constant 0 : index
    %c0_5 = arith.constant 0 : index
    %5 = vector.load %arg3[%c0_3, %c0_4, %c0_5] : memref<1x1x256xi32, #tpu.memory_space<vmem>>, vector<1x1x256xi32>
    %6 = vector.shape_cast %5 : vector<1x1x256xi32> to vector<1x256xi32>
    %c0_i32_6 = arith.constant 0 : i32
    %7 = vector.broadcast %c0_i32_6 : i32 to vector<1x256xi32>
    %8 = arith.cmpi slt, %6, %7 : vector<1x256xi32>
    %c255_i32 = arith.constant 255 : i32
    %9 = vector.broadcast %c255_i32 : i32 to vector<1x256xi32>
    %10 = arith.cmpi eq, %6, %9 : vector<1x256xi32>
    %11 = arith.ori %8, %10 : vector<1x256xi1>
    %c0_i32_7 = arith.constant 0 : i32
    %12 = vector.broadcast %c0_i32_7 : i32 to vector<1x256xi32>
    %13 = arith.select %11, %12, %6 : vector<1x256xi1>, vector<1x256xi32>
    %cst = arith.constant dense<0xFF800000> : vector<256xf32>
    %14 = vector.multi_reduction <maximumf>, %4, %cst [0] : vector<4x256xf32> to vector<256xf32>
    %15 = vector.shape_cast %14 : vector<256xf32> to vector<1x256xf32>
    %16 = vector.broadcast %15 : vector<1x256xf32> to vector<4x256xf32>
    %17 = arith.subf %4, %16 : vector<4x256xf32>
    %18 = math.exp %17 : vector<4x256xf32>
    %cst_8 = arith.constant dense<0.000000e+00> : vector<256xf32>
    %19 = vector.multi_reduction <add>, %18, %cst_8 [0] : vector<4x256xf32> to vector<256xf32>
    %20 = vector.shape_cast %19 : vector<256xf32> to vector<1x256xf32>
    %21 = math.log %20 : vector<1x256xf32>
    %22 = arith.addf %21, %15 : vector<1x256xf32>
    %23 = vector.broadcast %22 : vector<1x256xf32> to vector<4x256xf32>
    %24 = arith.subf %4, %23 : vector<4x256xf32>
    %25 = tpu.iota {dimensions = array<i32: 0>} : vector<4x256xi32>
    %26 = vector.broadcast %13 : vector<1x256xi32> to vector<4x256xi32>
    %27 = arith.cmpi eq, %25, %26 : vector<4x256xi32>
    %cst_9 = arith.constant 0.000000e+00 : f32
    %28 = vector.broadcast %cst_9 : f32 to vector<4x256xf32>
    %29 = arith.select %27, %24, %28 : vector<4x256xi1>, vector<4x256xf32>
    %cst_10 = arith.constant dense<0.000000e+00> : vector<256xf32>
    %30 = vector.multi_reduction <add>, %29, %cst_10 [0] : vector<4x256xf32> to vector<256xf32>
    %31 = vector.shape_cast %30 : vector<256xf32> to vector<1x256xf32>
    %cst_11 = arith.constant dense<0.000000e+00> : vector<256xf32>
    %32 = vector.multi_reduction <add>, %24, %cst_11 [0] : vector<4x256xf32> to vector<256xf32>
    %33 = vector.shape_cast %32 : vector<256xf32> to vector<1x256xf32>
    %cst_12 = arith.constant 0.000000e+00 : f32
    %34 = vector.broadcast %cst_12 : f32 to vector<1x256xf32>
    %35 = arith.select %8, %34, %31 : vector<1x256xi1>, vector<1x256xf32>
    %cst_13 = arith.constant 5.000000e-03 : f32
    %36 = vector.broadcast %cst_13 : f32 to vector<1x256xf32>
    %37 = arith.mulf %36, %33 : vector<1x256xf32>
    %cst_14 = arith.constant 0.89499998 : f32
    %38 = vector.broadcast %cst_14 : f32 to vector<1x256xf32>
    %39 = arith.mulf %38, %31 : vector<1x256xf32>
    %40 = arith.addf %37, %39 : vector<1x256xf32>
    %cst_15 = arith.constant 0.000000e+00 : f32
    %41 = vector.broadcast %cst_15 : f32 to vector<1x256xf32>
    %42 = arith.select %11, %41, %40 : vector<1x256xi1>, vector<1x256xf32>
    %cst_16 = arith.constant 0.000000e+00 : f32
    %cst_17 = arith.constant 1.000000e+00 : f32
    %43 = vector.broadcast %cst_16 : f32 to vector<1x256xf32>
    %44 = vector.broadcast %cst_17 : f32 to vector<1x256xf32>
    %45 = arith.select %11, %43, %44 : vector<1x256xi1>, vector<1x256xf32>
    %46 = tpu.concatenate %35, %42, %45 in 0 : vector<1x256xf32>, vector<1x256xf32>, vector<1x256xf32> -> vector<3x256xf32>
    %c0_18 = arith.constant 0 : index
    %c0_19 = arith.constant 0 : index
    %c0_20 = arith.constant 0 : index
    %47 = vector.load %arg4[%c0_18, %c0_19, %c0_20] : memref<1x3x256xf32, #tpu.memory_space<vmem>>, vector<1x3x256xf32>
    %48 = vector.shape_cast %46 : vector<3x256xf32> to vector<1x3x256xf32>
    %49 = arith.addf %47, %48 : vector<1x3x256xf32>
    %c0_21 = arith.constant 0 : index
    %c0_22 = arith.constant 0 : index
    %c0_23 = arith.constant 0 : index
    %50 = vector.load %arg4[%c0_21, %c0_22, %c0_23] : memref<1x3x256xf32, #tpu.memory_space<vmem>>, vector<1x3x256xf32>
    tpu.vector_store %arg4[%c0_21, %c0_22, %c0_23], %49 {strides = array<i32>} : memref<1x3x256xf32, #tpu.memory_space<vmem>>, vector<1x3x256xf32>,
    return
  }
  func.func @transform_0(%arg0: i32, %arg1: i32) -> (i32, i32, i32) {
    %c0_i32 = arith.constant 0 : i32
    %c0_i32_0 = arith.constant 0 : i32
    return %arg0, %c0_i32, %arg1 : i32, i32, i32
  }
  func.func @transform_1(%arg0: i32, %arg1: i32) -> (i32, i32, i32) {
    %c0_i32 = arith.constant 0 : i32
    %c0_i32_0 = arith.constant 0 : i32
    return %arg0, %c0_i32, %arg1 : i32, i32, i32
  }
  func.func @transform_2(%arg0: i32, %arg1: i32) -> (i32, i32, i32) {
    %c0_i32 = arith.constant 0 : i32
    %c0_i32_0 = arith.constant 0 : i32
    %c0_i32_1 = arith.constant 0 : i32
    return %arg0, %c0_i32, %c0_i32_0 : i32, i32, i32
  }
}

</mosaic_0001>

<llo_original>
// kernel: tpu_custom_call.1
$region0: #{tpu_custom_call.1}
  #allocation0 [shape = 'u32[]', space=smem, size = 0x4, offset = 0x4, fixed_abs, tag = 'smem constant byte address 0x4 - core index']
  #allocation1 [shape = 'u32[144,128]{1,0:T(1,128)}', space=vmem, size = 0x12000, scoped, tag = 'internal scratch']
  %s0 = inlined_call_operand.hbm [shape: f32[2,4,256], index: 0, kind: input, shape index: {}]
  %s1 = inlined_call_operand.hbm [shape: s32[2,1,256], index: 1, kind: input, shape index: {}]
  %s2 = inlined_call_operand.vmem [shape: f32[2,3,256], index: 2, kind: output, shape index: {}]
  %s3 = sld [smem:[#allocation0]]
  $region53: #{tpu_custom_call.1} parent=0
    _
  %s5 = ssub.s32 1, %s3
  %s6 = scalar_select 0, %s5, %s3
  $region1: #{tpu_custom_call.1} parent=0
    #allocation2 [shape = 'u8[8192]{0}', space=vmem, size = 0x2000, scoped, tag = 'input window, operand 0']
    #allocation3 [shape = 's32[2]{0}', space=sflag, size = 0x8, scoped, tag = 'scoped memory for tpu_custom_call.1']
    #allocation4 [shape = 'u8[2048]{0}', space=vmem, size = 0x800, scoped, tag = 'input window, operand 1']
    #allocation5 [shape = 's32[2]{0}', space=sflag, size = 0x8, scoped, tag = 'scoped memory for tpu_custom_call.1']
    %7 = vsyncpa [#allocation3], 0
    %s8 = scalar_lea.sflag [#allocation3], 1
    %9 = vsyncpa %s8, 0
    %10 = vsyncpa [#allocation5], 0
    %s11 = scalar_lea.sflag [#allocation5], 1
    %12 = vsyncpa %s11, 0
    loop: start=0, step=1, limit=4
    $region2: #{tpu_custom_call.1} parent=1 // loop_pre_header
      _
    $region3: #{tpu_custom_call.1} parent=1 // loop_header
      %s14 = sphi 0, %s18
      %p15 = scmp.ge.s32.totalorder %s14, 4
      %s21 = sphi 0, %s33
      %s22 = sphi 0, %s29
      %s23 = sphi 0, %s21
      %s24 = sphi 0, %s22
      %s25 = sphi 0, %s23
      %s26 = sphi 0, %s24
      %s38 = sphi 0, %s40
      %s41 = sphi 0, %s38
      %s42 = sphi 0, %s41
      %s58 = sphi 0, %s42
      %s66 = sphi 0, %s68
      %s69 = sphi 0, %s66
      %s70 = sphi 0, %s69
      %s86 = sphi 0, %s70
      %s92 = sphi 0, %s94
      %s95 = sphi 0, %s92
      %s96 = sphi 0, %s95
      %s112 = sphi 0, %s96
    $region4: #{tpu_custom_call.1} parent=1 // loop_header_branch
      %17 = sbr.rel (%p15) target = $region8
    $region5: #{tpu_custom_call.1} parent=1 // loop_body
      %s19 = ssub.s32 %s14, 1
      %s20 = ssub.s32 %s14, 2
      %s27 = sadd.s32 1, %s22
      %p28 = scmp.ge.s32.totalorder %s27, 1
      %s29 = scalar_select %p28, 0, %s27
      %s30 = sadd.s32 1, %s21
      %s31 = scalar_select %p28, %s30, %s21
      %p32 = scmp.ge.s32.totalorder %s31, 2
      %s33 = scalar_select %p32, 0, %s31
      %s34 = ssub.s32 %s21, %s33
      %s35 = ssub.s32 %s22, %s29
      %s36 = sor.u32 %s34, %s35
      %p37 = scmp.eq.s32.totalorder %s36, 0
      %s39 = sadd.s32 %s38, 1
      %s40 = scalar_select %p37, %s38, %s39
      %p43 = pneg %p37
      %p44 = scmp.eq.s32.totalorder %s14, 1
      %p45 = por %p43, %p44
      %p46 = scmp.ne.s32.totalorder %s38, %s41
      %p47 = scmp.eq.s32.totalorder %s14, 0
      %p48 = por %p46, %p47
      %p49 = scmp.ne.s32.totalorder %s38, %s41
      %p50 = scmp.eq.s32.totalorder %s19, 1
      %p51 = por %p49, %p50
      %p52 = scmp.ne.s32.totalorder %s41, %s42
      %p53 = scmp.eq.s32.totalorder %s19, 0
      %p54 = por %p52, %p53
      %p55 = scmp.ne.s32.totalorder %s41, %s42
      %p56 = scmp.eq.s32.totalorder %s20, 1
      %p57 = por %p55, %p56
      %p59 = scmp.ne.s32.totalorder %s42, %s58
      %p60 = scmp.eq.s32.totalorder %s20, 0
      %p61 = por %p59, %p60
      %s62 = ssub.s32 %s21, %s33
      %s63 = ssub.s32 %s22, %s29
      %s64 = sor.u32 %s62, %s63
      %p65 = scmp.eq.s32.totalorder %s64, 0
      %s67 = sadd.s32 %s66, 1
      %s68 = scalar_select %p65, %s66, %s67
      %p71 = pneg %p65
      %p72 = scmp.eq.s32.totalorder %s14, 1
      %p73 = por %p71, %p72
      %p74 = scmp.ne.s32.totalorder %s66, %s69
      %p75 = scmp.eq.s32.totalorder %s14, 0
      %p76 = por %p74, %p75
      %p77 = scmp.ne.s32.totalorder %s66, %s69
      %p78 = scmp.eq.s32.totalorder %s19, 1
      %p79 = por %p77, %p78
      %p80 = scmp.ne.s32.totalorder %s69, %s70
      %p81 = scmp.eq.s32.totalorder %s19, 0
      %p82 = por %p80, %p81
      %p83 = scmp.ne.s32.totalorder %s69, %s70
      %p84 = scmp.eq.s32.totalorder %s20, 1
      %p85 = por %p83, %p84
      %p87 = scmp.ne.s32.totalorder %s70, %s86
      %p88 = scmp.eq.s32.totalorder %s20, 0
      %p89 = por %p87, %p88
      %s90 = ssub.s32 %s21, %s33
      %p91 = scmp.eq.s32.totalorder %s90, 0
      %s93 = sadd.s32 %s92, 1
      %s94 = scalar_select %p91, %s92, %s93
      %p97 = pneg %p91
      %p98 = scmp.eq.s32.totalorder %s14, 1
      %p99 = por %p97, %p98
      %p100 = scmp.ne.s32.totalorder %s92, %s95
      %p101 = scmp.eq.s32.totalorder %s14, 0
      %p102 = por %p100, %p101
      %p103 = scmp.ne.s32.totalorder %s92, %s95
      %p104 = scmp.eq.s32.totalorder %s19, 1
      %p105 = por %p103, %p104
      %p106 = scmp.ne.s32.totalorder %s95, %s96
      %p107 = scmp.eq.s32.totalorder %s19, 0
      %p108 = por %p106, %p107
      %p109 = scmp.ne.s32.totalorder %s95, %s96
      %p110 = scmp.eq.s32.totalorder %s20, 1
      %p111 = por %p109, %p110
      %p113 = scmp.ne.s32.totalorder %s96, %s112
      %p114 = scmp.eq.s32.totalorder %s20, 0
      %p115 = por %p113, %p114
      %p116 = scmp.le.s32.totalorder 1, %s14
      %p117 = scmp.lt.s32.totalorder %s14, 3
      %p118 = pnand %p116, %p117
      %p119 = pneg %p118
      // Predicated region
      $region9: #{tpu_custom_call.1} parent=5 // pred_check
        _
      $region10: #{tpu_custom_call.1} parent=5 // pred_check_branch
        %121 = sbr.rel (%p118) target = $region12
      $region11: #{tpu_custom_call.1} parent=5 // pred_region
        %s122 = ssub.s32 %s14, 1
      $region12: #{tpu_custom_call.1} parent=5 // pred_fallthru
        _
      %p123 = scmp.lt.s32.totalorder %s14, 2
      // Predicated region
      $region13: #{tpu_custom_call.1} parent=5 // pred_check
        %p124 = pneg %p123
      $region14: #{tpu_custom_call.1} parent=5 // pred_check_branch
        %126 = sbr.rel (%p124) target = $region16
      $region15: #{tpu_custom_call.1} parent=5 // pred_region
        // Predicated region
        $region17: #{tpu_custom_call.1} parent=15 // pred_check
          %p127 = pneg %p48
        $region18: #{tpu_custom_call.1} parent=15 // pred_check_branch
          %129 = sbr.rel (%p127) target = $region20
        $region19: #{tpu_custom_call.1} parent=15 // pred_region
          %s130 = sand.u32 %s38, 1
          %s131 = scalar_lea.sflag [#allocation3], %s130
          %s132 = sand.u32 %s38, 1
          %s133 = smul.addr %s132, 8
          %s134 = scalar_lea.vmem [#allocation2], %s133
          %s135 = smul.u32 2, %s22
          %s137 = ssub.s32 128, 128
          %138 = vsyncadd %s131, %s137
          %s139 = smul.addr %s21, 2
          %s140 = sadd.s32 %s135, %s139
          %s141 = smul.addr %s140, 64
          %s142 = scalar_lea.hbm %s0, %s141
          %s144 = sshll.u32 %s134, 4
          %s145 = int_to_ptr.vmem [resolvable:$true] %s144
          %147 = dma.hbm_to_vmem [thread:$0]  %s142, 128, %s145, %s131
        $region20: #{tpu_custom_call.1} parent=15 // pred_fallthru
          _
        // Predicated region
        $region21: #{tpu_custom_call.1} parent=15 // pred_check
          %p148 = pneg %p76
        $region22: #{tpu_custom_call.1} parent=15 // pred_check_branch
          %150 = sbr.rel (%p148) target = $region24
        $region23: #{tpu_custom_call.1} parent=15 // pred_region
          %s151 = sand.u32 %s66, 1
          %s152 = scalar_lea.sflag [#allocation5], %s151
          %s153 = sand.u32 %s66, 1
          %s154 = smul.addr %s153, 2
          %s155 = scalar_lea.vmem [#allocation4], %s154
          %s156 = smul.u32 2, %s22
          %s158 = ssub.s32 32, 32
          %159 = vsyncadd %s152, %s158
          %s160 = smul.addr %s21, 2
          %s161 = sadd.s32 %s156, %s160
          %s162 = smul.addr %s161, 16
          %s163 = scalar_lea.hbm %s1, %s162
          %s165 = sshll.u32 %s155, 4
          %s166 = int_to_ptr.vmem [resolvable:$true] %s165
          %168 = dma.hbm_to_vmem [thread:$0]  %s163, 32, %s166, %s152
        $region24: #{tpu_custom_call.1} parent=15 // pred_fallthru
          _
      $region16: #{tpu_custom_call.1} parent=5 // pred_fallthru
        _
      %p169 = scmp.le.s32.totalorder 1, %s14
      %p170 = scmp.lt.s32.totalorder %s14, 3
      %p171 = pnand %p169, %p170
      %p172 = pneg %p171
      // Predicated region
      $region25: #{tpu_custom_call.1} parent=5 // pred_check
        _
      $region26: #{tpu_custom_call.1} parent=5 // pred_check_branch
        %174 = sbr.rel (%p171) target = $region28
      $region27: #{tpu_custom_call.1} parent=5 // pred_region
        %s175 = ssub.s32 %s14, 1
        %s176 = sand.u32 %s41, 1
        %s177 = scalar_lea.sflag [#allocation3], %s176
        %s178 = sand.u32 %s41, 1
        %s179 = smul.addr %s178, 8
        %s180 = scalar_lea.vmem [#allocation2], %s179
        // Predicated region
        $region29: #{tpu_custom_call.1} parent=27 // pred_check
          %p181 = pneg %p54
        $region30: #{tpu_custom_call.1} parent=27 // pred_check_branch
          %183 = sbr.rel (%p181) target = $region32
        $region31: #{tpu_custom_call.1} parent=27 // pred_region
          %184 = dma.done %s177, 128
        $region32: #{tpu_custom_call.1} parent=27 // pred_fallthru
          _
        %s185 = sand.u32 %s69, 1
        %s186 = scalar_lea.sflag [#allocation5], %s185
        %s187 = sand.u32 %s69, 1
        %s188 = smul.addr %s187, 2
        %s189 = scalar_lea.vmem [#allocation4], %s188
        // Predicated region
        $region33: #{tpu_custom_call.1} parent=27 // pred_check
          %p190 = pneg %p82
        $region34: #{tpu_custom_call.1} parent=27 // pred_check_branch
          %192 = sbr.rel (%p190) target = $region36
        $region35: #{tpu_custom_call.1} parent=27 // pred_region
          %193 = dma.done %s186, 32
        $region36: #{tpu_custom_call.1} parent=27 // pred_fallthru
          _
        %s194 = sand.u32 %s41, 1
        %s195 = scalar_lea.sflag [#allocation3], %s194
        %s196 = sand.u32 %s41, 1
        %s197 = smul.addr %s196, 8
        %s198 = scalar_lea.vmem [#allocation2], %s197
        %p199 = pneg %p54
        %p200 = pneg %p51
        %s201 = sand.u32 %s69, 1
        %s202 = scalar_lea.sflag [#allocation5], %s201
        %s203 = sand.u32 %s69, 1
        %s204 = smul.addr %s203, 2
        %s205 = scalar_lea.vmem [#allocation4], %s204
        %p206 = pneg %p82
        %p207 = pneg %p79
        %p208 = pneg %p108
        %p209 = pneg %p105
        %p210 = scmp.lt.s32.totalorder %s23, 1
        %s211 = scalar_select %p210, %s23, 1
        %s212 = smul.addr %s211, 2
        %s213 = smul.addr %s212, 4
        %s214 = scalar_lea.vmem %s2, %s213
        %s215 = smul.u32 2, %s24
        %s216 = smul.u32 2, %s24
        %p217 = scmp.lt.s32.totalorder %s23, 1
        %s218 = scalar_select %p217, %s23, 1
        %s219 = smul.addr %s218, 2
        %s220 = smul.addr %s219, 4
        %s221 = scalar_lea.vmem %s2, %s220
        %p222 = scmp.eq.s32.totalorder %s24, 0
        // Predicated region
        $region37: #{tpu_custom_call.1} parent=27 // pred_check
          %p223 = pneg %p222
        $region38: #{tpu_custom_call.1} parent=27 // pred_check_branch
          %225 = sbr.rel (%p223) target = $region40
        $region39: #{tpu_custom_call.1} parent=27 // pred_region
          %226 = vst [vmem:[%s221] sm:$0x77] 0.0
        $region40: #{tpu_custom_call.1} parent=27 // pred_fallthru
          _
        %v227 = vld [vmem:[%s180] sm:$0xff]
        %v228 = vld [vmem:[%s189] sm:$0x3]
        %vm229 = vcmp.lt.s32.totalorder %v228, 0
        %vm230 = vcmp.eq.s32.totalorder %v228, 255
        %vm231 = vmor %vm229, %vm230
        %v232 = vsel %vm231, 0, %v228
        %v234 = vcombine.high %v227, %v227
        %vm236 = vcmask 1043456
        %v237 = vsel %vm236, %v227, -inf
        %v238 = vrot.slane %v237, 4
        %v239 = vmax.f32 %v237, %v238
        %v240 = vrot.slane %v239, 2
        %v241 = vmax.f32 %v239, %v240
        %v242 = vrot.slane %v241, 1
        %v243 = vmax.f32 %v241, %v242
        %v244 = vsel %vm236, %v234, -inf
        %v245 = vrot.slane %v244, 4
        %v246 = vmax.f32 %v244, %v245
        %v247 = vrot.slane %v246, 2
        %v248 = vmax.f32 %v246, %v247
        %v249 = vrot.slane %v248, 1
        %v250 = vmax.f32 %v248, %v249
        %v253 = vcombine.low %v243, %v250
        %v255 = vsub.f32 %v227, %v253
        %v256 = vmul.f32 %v255, 1.442695
        %v257 = vpow.pop %v256
        %v259 = vcombine.high %v257, %v257
        %v261 = vsel %vm236, %v257, 0.0
        %v262 = vrot.slane %v261, 4
        %v263 = vadd.f32 %v261, %v262
        %v264 = vrot.slane %v263, 2
        %v265 = vadd.f32 %v263, %v264
        %v266 = vrot.slane %v265, 1
        %v267 = vadd.f32 %v265, %v266
        %v268 = vsel %vm236, %v259, 0.0
        %v269 = vrot.slane %v268, 4
        %v270 = vadd.f32 %v268, %v269
        %v271 = vrot.slane %v270, 2
        %v272 = vadd.f32 %v270, %v271
        %v273 = vrot.slane %v272, 1
        %v274 = vadd.f32 %v272, %v273
        %v275 = vlog2.pop %v267
        %v276 = vmul.f32 %v275, 0.6931472
        %v277 = vlog2.pop %v274
        %v278 = vmul.f32 %v277, 0.6931472
        %v279 = vadd.f32 %v276, %v243
        %v280 = vadd.f32 %v278, %v250
        %v283 = vcombine.low %v279, %v280
        %v285 = vsub.f32 %v227, %v283
        %v286 = vlaneseq
        %v287 = vshrl.u32 %v286, 7
        %v288 = vlaneseq
        %v289 = vshrl.u32 %v288, 7
        %v290 = vsub.s32 0, %v289
        %v291 = vrot.slane %v232, %v290
        %v292 = vlaneseq
        %v293 = vshrl.u32 %v292, 7
        %v294 = vsub.s32 1, %v293
        %v295 = vrot.slane %v232, %v294
        %vm296 = vcmp.eq.s32.totalorder %v287, %v291
        %vm297 = vcmp.eq.s32.totalorder %v287, %v295
        %v299 = vcombine.high %v285, %v285
        %v301 = vsel %vm296, %v285, 0.0
        %v302 = vsel %vm297, %v299, 0.0
        %v303 = vsel %vm236, %v301, 0.0
        %v304 = vrot.slane %v303, 4
        %v305 = vadd.f32 %v303, %v304
        %v306 = vrot.slane %v305, 2
        %v307 = vadd.f32 %v305, %v306
        %v308 = vrot.slane %v307, 1
        %v309 = vadd.f32 %v307, %v308
        %v310 = vsel %vm236, %v302, 0.0
        %v311 = vrot.slane %v310, 4
        %v312 = vadd.f32 %v310, %v311
        %v313 = vrot.slane %v312, 2
        %v314 = vadd.f32 %v312, %v313
        %v315 = vrot.slane %v314, 1
        %v316 = vadd.f32 %v314, %v315
        %v317 = vsel %vm236, %v285, 0.0
        %v318 = vrot.slane %v317, 4
        %v319 = vadd.f32 %v317, %v318
        %v320 = vrot.slane %v319, 2
        %v321 = vadd.f32 %v319, %v320
        %v322 = vrot.slane %v321, 1
        %v323 = vadd.f32 %v321, %v322
        %v324 = vsel %vm236, %v299, 0.0
        %v325 = vrot.slane %v324, 4
        %v326 = vadd.f32 %v324, %v325
        %v327 = vrot.slane %v326, 2
        %v328 = vadd.f32 %v326, %v327
        %v329 = vrot.slane %v328, 1
        %v330 = vadd.f32 %v328, %v329
        %v333 = vcombine.low %v309, %v316
        %v335 = vunpack.c.l.s4 1966171168
        %v336 = vunpack.c.0.s8 %v335
        %v337 = vlaneseq
        %v338 = vshrl.u32 %v337, 7
        %v339 = vsub.s32 %v336, %v338
        %v340 = vrot.slane %v333, %v339
        %v342 = vunpack.c.l.s4 1966171168
        %v343 = vunpack.c.0.s8 %v342
        %v344 = vlaneseq
        %v345 = vshrl.u32 %v344, 7
        %v346 = vsub.s32 %v343, %v345
        %v347 = vrot.slane %v340, %v346
        %v349 = vsel %vm229, 0.0, %v347
        %v350 = vmul.f32 %v323, 0.005
        %v351 = vmul.f32 %v330, 0.005
        %v352 = vmul.f32 %v309, 0.895
        %v353 = vmul.f32 %v316, 0.895
        %v354 = vadd.f32 %v350, %v352
        %v355 = vadd.f32 %v351, %v353
        %v358 = vcombine.low %v354, %v355
        %v360 = vunpack.c.l.s4 1966171168
        %v361 = vunpack.c.0.s8 %v360
        %v362 = vlaneseq
        %v363 = vshrl.u32 %v362, 7
        %v364 = vsub.s32 %v361, %v363
        %v365 = vrot.slane %v358, %v364
        %v367 = vunpack.c.l.s4 1966171168
        %v368 = vunpack.c.0.s8 %v367
        %v369 = vlaneseq
        %v370 = vshrl.u32 %v369, 7
        %v371 = vsub.s32 %v368, %v370
        %v372 = vrot.slane %v365, %v371
        %v374 = vsel %vm231, 0.0, %v372
        %v375 = vsel %vm231, 0.0, 1.0
        %v377 = vlaneseq
        %v378 = vshrl.u32 %v377, 7
        %v379 = vsub.s32 0, %v378
        %v380 = vrot.slane %v349, %v379
        %v381 = vlaneseq
        %v382 = vshrl.u32 %v381, 7
        %v383 = vsub.s32 1, %v382
        %v384 = vrot.slane %v349, %v383
        %v388 = vlaneseq
        %v389 = vshrl.u32 %v388, 7
        %v390 = vsub.s32 0, %v389
        %v391 = vrot.slane %v374, %v390
        %v392 = vlaneseq
        %v393 = vshrl.u32 %v392, 7
        %v394 = vsub.s32 1, %v393
        %v395 = vrot.slane %v374, %v394
        %v399 = vlaneseq
        %v400 = vshrl.u32 %v399, 7
        %v401 = vsub.s32 0, %v400
        %v402 = vrot.slane %v375, %v401
        %v403 = vlaneseq
        %v404 = vshrl.u32 %v403, 7
        %v405 = vsub.s32 1, %v404
        %v406 = vrot.slane %v375, %v405
        %vm409 = vcmask 1040384
        %v410 = vsel %vm409, %v380, %v391
        %v411 = vsel %vm409, %v384, %v395
        %vm412 = vcmask 1041408
        %v413 = vsel %vm412, %v410, %v402
        %v414 = vsel %vm412, %v411, %v406
        %v415 = vld [vmem:[%s221] sm:$0x77]
        %v418 = vcombine.low %v413, %v414
        %v420 = vadd.f32 %v415, %v418
        %421 = vst [vmem:[%s221] sm:$0x77] %v420
        %p422 = scmp.lt.s32.totalorder %s23, 1
        %s423 = scalar_select %p422, %s23, 1
        %s424 = smul.addr %s423, 2
        %s425 = smul.addr %s424, 4
        %s426 = scalar_lea.vmem %s2, %s425
        // Predicated region
        $region41: #{tpu_custom_call.1} parent=27 // pred_check
          %p427 = pneg %p105
        $region42: #{tpu_custom_call.1} parent=27 // pred_check_branch
          %429 = sbr.rel (%p427) target = $region44
        $region43: #{tpu_custom_call.1} parent=27 // pred_region
          _
        $region44: #{tpu_custom_call.1} parent=27 // pred_fallthru
          _
      $region28: #{tpu_custom_call.1} parent=5 // pred_fallthru
        _
      %p430 = scmp.le.s32.totalorder 2, %s14
      // Predicated region
      $region45: #{tpu_custom_call.1} parent=5 // pred_check
        %p431 = pneg %p430
      $region46: #{tpu_custom_call.1} parent=5 // pred_check_branch
        %433 = sbr.rel (%p431) target = $region48
      $region47: #{tpu_custom_call.1} parent=5 // pred_region
        %s434 = ssub.s32 %s14, 2
        // Predicated region
        $region49: #{tpu_custom_call.1} parent=47 // pred_check
          %p435 = pneg %p111
        $region50: #{tpu_custom_call.1} parent=47 // pred_check_branch
          %437 = sbr.rel (%p435) target = $region52
        $region51: #{tpu_custom_call.1} parent=47 // pred_region
          %p438 = scmp.lt.s32.totalorder %s25, 1
          %s439 = scalar_select %p438, %s25, 1
          %s440 = smul.addr %s439, 2
          %s441 = smul.addr %s440, 4
          %s442 = scalar_lea.vmem %s2, %s441
        $region52: #{tpu_custom_call.1} parent=47 // pred_fallthru
          _
      $region48: #{tpu_custom_call.1} parent=5 // pred_fallthru
        _
    $region6: #{tpu_custom_call.1} parent=1 // loop_footer
      %s18 = sadd.s32 1, %s14
    $region7: #{tpu_custom_call.1} parent=1 // loop_footer_branch
      %13 = sbr.rel target = $region3
    $region8: #{tpu_custom_call.1} parent=1 // loop_exit
      _
    %443 = vsyncpa [#allocation3], 1
    %s444 = scalar_lea.sflag [#allocation3], 1
    %445 = vsyncpa %s444, 1
    %446 = vsyncpa [#allocation5], 1
    %s447 = scalar_lea.sflag [#allocation5], 1
    %448 = vsyncpa %s447, 1

</llo_original>
